<compile_context>
chip_gen: v5e
topology: v5e:2x2
jax: 0.10.0
libtpu: 0.0.40
codegen_flags: <defaults>
</compile_context>

<pallas_src>
import math

import jax
import jax.numpy as jnp
from jax.experimental import pallas as pl
from jax.experimental.pallas import tpu as pltpu


def _cdiv(a, b):
    return -(-a // b)


def _round_up(a, b):
    return _cdiv(a, b) * b


def _lcm(a, b):
    return a * b // math.gcd(a, b)


def _rrwp_node_encoder_kernel(rrwp_ref, w_ref, x_ref, o_ref):
    # rrwp_ref: (T, F_emb), w_ref: (F_emb, F_out), x_ref / o_ref: (T, F_out)
    proj = jnp.dot(rrwp_ref[...], w_ref[...], preferred_element_type=jnp.float32)
    o_ref[...] = (x_ref[...].astype(jnp.float32) + proj).astype(o_ref.dtype)


_WEIGHT_VMEM_CAP = 4 * 1024 * 1024  # keep the resident (block-diagonal) weight small


def _choose_fold(emb_dim, out_dim, w_itemsize, max_fold=8):
    """Rows folded together so the kernel's last dims are lane-dense (x128)."""

    def weight_fits(f):
        return (f * emb_dim) * (f * out_dim) * w_itemsize <= _WEIGHT_VMEM_CAP

    fold = _lcm(128 // math.gcd(out_dim, 128), 128 // math.gcd(emb_dim, 128))
    if fold > max_fold or not weight_fits(fold):
        # Fall back to output-lane density only (dense stores are the biggest lever).
        fold = 128 // math.gcd(out_dim, 128)
        if fold > max_fold or not weight_fits(fold):
            fold = 1
    return fold


def _vmem_limit_bytes():
    """Generation-aware VMEM cap: ~48 MiB on v7x (64 MiB/TC), 96 MiB on v5e/v6e."""
    phys = 64 * 1024 * 1024  # conservative default = v7x per-TensorCore VMEM
    try:
        info = pltpu.get_tpu_info()
        for attr in ("vmem_capacity_bytes", "vmem_size_bytes", "vmem_bytes"):
            val = getattr(info, attr, None)
            if val:
                phys = int(val)
                break
    except Exception:
        pass
    return min(phys * 3 // 4, 96 * 1024 * 1024)


def rrwp_linear_node_encoder_folded(x, rrwp, w_big, fold, *, tile_rows=4096):
    """out = x + rrwp @ W.T, with w_big = kron(I_fold, W.T) pre-built by the caller.

    x: [N, out_dim], rrwp: [N, emb_dim], w_big: [fold*emb_dim, fold*out_dim].
    Returns [N, out_dim] with the same dtype as x.
    """
    N, out_dim = x.shape
    n_r, emb_dim = rrwp.shape
    assert n_r == N, "x and rrwp must have the same number of rows"
    f_emb, f_out = fold * emb_dim, fold * out_dim
    assert w_big.shape == (f_emb, f_out)

    x_it = jnp.dtype(x.dtype).itemsize
    r_it = jnp.dtype(rrwp.dtype).itemsize
    w_it = jnp.dtype(w_big.dtype).itemsize
    weight_bytes = f_emb * f_out * w_it

    # Minimal padding: N only has to be a multiple of `fold` for the lane-density
    # reshape.  When it already is, this path is zero-copy (no jnp.pad / out slice).
    n_pad = _round_up(N, fold)
    if n_pad != N:
        # TODO(synk): a <fold-row plain-JAX epilogue would avoid even this small pad copy.
        x_in = jnp.pad(x, ((0, n_pad - N), (0, 0)))
        r_in = jnp.pad(rrwp, ((0, n_pad - N), (0, 0)))
    else:
        x_in, r_in = x, rrwp

    n_f = n_pad // fold
    x_f = x_in.reshape(n_f, f_out)   # row-major re-view: free, no data movement
    r_f = r_in.reshape(n_f, f_emb)

    # ---- VMEM plan & tile sizing (folded rows per grid step) ----------------------
    vmem_limit = _vmem_limit_bytes()
    # rrwp/x/out tiles are double-buffered by the pipeline.  The weight has a constant
    # index_map (fetched once), but reserve its two pipeline buffers to stay safely
    # under vmem_limit_bytes.  Per-operand itemsizes (rrwp may differ from x).
    bytes_per_row = f_emb * r_it + 2 * f_out * x_it
    budget = vmem_limit - 2 * weight_bytes - (2 << 20)  # headroom for compiler scratch
    # Sublane granularity: 8 rows for f32, 16 for bf16, 32 for 8-bit dtypes.
    sub = max(8 * (4 // x_it), 8 * (4 // r_it), 8)
    max_tile = max(sub, (budget // (2 * bytes_per_row)) // sub * sub)

    tile = min(tile_rows, max_tile)
    tile = max(sub, tile // sub * sub)
    # v7x megacore: keep >=4 grid steps when there is enough work, so the "parallel"
    # axis actually splits across both TensorCores.  No effect on v5e/v6e (1 TC).
    if n_f >= 8 * sub:
        tile = min(tile, max(sub, _round_up(_cdiv(n_f, 4), sub)))
    if tile >= n_f:
        tile = n_f  # single block equal to the full row extent (always a legal block)

    grid = (_cdiv(n_f, tile),)  # partial last block: writes masked by Pallas

    cost = pl.CostEstimate(
        flops=2 * N * emb_dim * out_dim,
        transcendentals=0,
        bytes_accessed=N * (emb_dim * r_it + 2 * out_dim * x_it) + weight_bytes,
    )

    out_f = pl.pallas_call(
        _rrwp_node_encoder_kernel,
        out_shape=jax.ShapeDtypeStruct((n_f, f_out), x.dtype),
        grid_spec=pltpu.PrefetchScalarGridSpec(
            num_scalar_prefetch=0,
            grid=grid,
            in_specs=[
                pl.BlockSpec((tile, f_emb), lambda i: (i, 0)),    # folded rrwp tile
                pl.BlockSpec((f_emb, f_out), lambda i: (0, 0)),   # resident block-diag weight
                pl.BlockSpec((tile, f_out), lambda i: (i, 0)),    # folded x tile
            ],
            out_specs=pl.BlockSpec((tile, f_out), lambda i: (i, 0)),
        ),
        compiler_params=pltpu.CompilerParams(
            dimension_semantics=("parallel",),
            vmem_limit_bytes=int(vmem_limit),
        ),
        cost_estimate=cost,
    )(r_f, w_big, x_f)

    out = out_f.reshape(n_pad, out_dim)
    return out[:N] if n_pad != N else out


def make_rrwp_node_encoder(w_t, *, tile_rows=4096, max_fold=8):
    """Prepare the block-diagonal weight once; return apply(x, rrwp) -> out.

    w_t: [emb_dim, out_dim] (Linear weight transposed).  The kron(I_fold, W.T) is
    hoisted here so it is NOT re-executed on every forward — it only needs to be
    rebuilt when the parameter changes.
    """
    emb_dim, out_dim = w_t.shape
    fold = _choose_fold(emb_dim, out_dim, jnp.dtype(w_t.dtype).itemsize, max_fold)
    if fold > 1:
        w_big = jnp.kron(jnp.eye(fold, dtype=w_t.dtype), w_t)
    else:
        w_big = w_t

    def apply(x, rrwp):
        return rrwp_linear_node_encoder_folded(x, rrwp, w_big, fold, tile_rows=tile_rows)

    return apply


def xavier_uniform(key, shape, dtype=jnp.float32):
    # PyTorch xavier_uniform_ on Linear weight [out_dim, emb_dim]:
    # bound = sqrt(6 / (fan_in + fan_out)) = sqrt(6 / (emb_dim + out_dim))
    out_dim, emb_dim = shape
    bound = (6.0 / (emb_dim + out_dim)) ** 0.5
    return jax.random.uniform(key, shape, dtype, minval=-bound, maxval=bound)


if __name__ == "__main__":
    key = jax.random.PRNGKey(0)
    k_w, k_x, k_r = jax.random.split(key, 3)

    N = 256        # number of nodes (multiple of fold -> zero-copy path)
    emb_dim = 32   # RRWP positional-encoding dimension
    out_dim = 64   # node hidden dimension

    # Deterministic parameter init (matches nn.Linear weight shape [out_dim, emb_dim]).
    W = xavier_uniform(k_w, (out_dim, emb_dim))

    x = jax.random.normal(k_x, (N, out_dim), dtype=jnp.float32)
    rrwp = jax.random.normal(k_r, (N, emb_dim), dtype=jnp.float32)

    # Weight prep (fold selection + kron) happens once, outside the jitted hot path.
    encoder = jax.jit(make_rrwp_node_encoder(W.T))
    out = jax.block_until_ready(encoder(x, rrwp))

    # Reference check in plain JAX (same math as the PyTorch forward).
    ref = x + rrwp @ W.T
    assert out.shape == (N, out_dim)
    assert jnp.allclose(out, ref, atol=1e-5, rtol=1e-5), "mismatch vs reference"

    print("KERNEL_OK")
</pallas_src>

<mosaic_0001>
module attributes {stable_mosaic.version = 11 : i64} {
  func.func @_rrwp_node_encoder_kernel(%arg0: i32, %arg1: memref<16x128xf32, #tpu.memory_space<vmem>>, %arg2: memref<128x256xf32, #tpu.memory_space<vmem>>, %arg3: memref<16x256xf32, #tpu.memory_space<vmem>>, %arg4: memref<16x256xf32, #tpu.memory_space<vmem>>) attributes {dimension_semantics = [#tpu.dimension_semantics<parallel>], iteration_bounds = array<i64: 4>, scalar_prefetch = 0 : i64, scratch_operands = 0 : i64, tpu.core_type = #tpu.core_type<tc>, window_params = [{transform_indices = @transform_0, window_bounds = array<i64: 16, 128>}, {pipeline_mode = #tpu.pipeline_mode<synchronous>, transform_indices = @transform_1, window_bounds = array<i64: 128, 256>}, {transform_indices = @transform_2, window_bounds = array<i64: 16, 256>}, {transform_indices = @transform_3, window_bounds = array<i64: 16, 256>}]} {
    %c0 = arith.constant 0 : index
    %c0_0 = arith.constant 0 : index
    %0 = vector.load %arg1[%c0, %c0_0] : memref<16x128xf32, #tpu.memory_space<vmem>>, vector<16x128xf32>
    %c0_1 = arith.constant 0 : index
    %c0_2 = arith.constant 0 : index
    %1 = vector.load %arg2[%c0_1, %c0_2] : memref<128x256xf32, #tpu.memory_space<vmem>>, vector<128x256xf32>
    %cst = arith.constant dense<0.000000e+00> : vector<16x256xf32>
    %2 = tpu.matmul %0, %1, %cst {dimension_numbers = #tpu.dot_dimension_numbers<[1], [0], [0], [1], [0, 0, 1, 1], [], []>} : vector<16x128xf32>, vector<128x256xf32>, vector<16x256xf32> -> vector<16x256xf32>
    %c0_3 = arith.constant 0 : index
    %c0_4 = arith.constant 0 : index
    %3 = vector.load %arg3[%c0_3, %c0_4] : memref<16x256xf32, #tpu.memory_space<vmem>>, vector<16x256xf32>
    %4 = arith.addf %3, %2 : vector<16x256xf32>
    %c0_5 = arith.constant 0 : index
    %c0_6 = arith.constant 0 : index
    %5 = vector.load %arg4[%c0_5, %c0_6] : memref<16x256xf32, #tpu.memory_space<vmem>>, vector<16x256xf32>
    tpu.vector_store %arg4[%c0_5, %c0_6], %4 {strides = array<i32>} : memref<16x256xf32, #tpu.memory_space<vmem>>, vector<16x256xf32>,
    return
  }
  func.func @transform_0(%arg0: i32) -> (i32, i32) {
    %c0_i32 = arith.constant 0 : i32
    %c0_i32_0 = arith.constant 0 : i32
    return %arg0, %c0_i32 : i32, i32
  }
  func.func @transform_1(%arg0: i32) -> (i32, i32) {
    %c0_i32 = arith.constant 0 : i32
    %c0_i32_0 = arith.constant 0 : i32
    %c0_i32_1 = arith.constant 0 : i32
    return %c0_i32, %c0_i32_0 : i32, i32
  }
  func.func @transform_2(%arg0: i32) -> (i32, i32) {
    %c0_i32 = arith.constant 0 : i32
    %c0_i32_0 = arith.constant 0 : i32
    return %arg0, %c0_i32 : i32, i32
  }
  func.func @transform_3(%arg0: i32) -> (i32, i32) {
    %c0_i32 = arith.constant 0 : i32
    %c0_i32_0 = arith.constant 0 : i32
    return %arg0, %c0_i32 : i32, i32
  }
}

</mosaic_0001>

<llo_original>
// kernel: apply.1
$region0: #{apply.1}
  #allocation0 [shape = 'u32[]', space=smem, size = 0x4, offset = 0x4, fixed_abs, tag = 'smem constant byte address 0x4 - core index']
  #allocation1 [shape = 'u32[72,128]{1,0:T(1,128)}', space=vmem, size = 0x9000, scoped, tag = 'internal scratch']
  %s0 = inlined_call_operand.vmem [shape: f32[64,128], index: 0, kind: input, shape index: {}]
  %s1 = inlined_call_operand.vmem [shape: f32[128,256], index: 1, kind: input, shape index: {}]
  %s2 = inlined_call_operand.vmem [shape: f32[64,256], index: 2, kind: input, shape index: {}]
  %s3 = inlined_call_operand.vmem [shape: f32[64,256], index: 3, kind: output, shape index: {}]
  %s4 = sld [smem:[#allocation0]]
  $region45: #{apply.1} parent=0
    _
  %s6 = ssub.s32 1, %s4
  %s7 = scalar_select 0, %s6, %s4
  loop: start=0, step=1, limit=6
  $region2: #{apply.1} parent=0 // loop_pre_header
    _
  $region3: #{apply.1} parent=0 // loop_header
    %s9 = sphi 0, %s13
    %p10 = scmp.ge.s32.totalorder %s9, 6
    %s19 = sphi 0, %s21
    %s22 = sphi 0, %s19
    %s23 = sphi 0, %s22
    %s39 = sphi 0, %s23
    %s43 = sphi 0, %s43
    %s45 = sphi 0, %s43
    %s46 = sphi 0, %s45
    %s60 = sphi 0, %s46
    %s66 = sphi 0, %s68
    %s69 = sphi 0, %s66
    %s70 = sphi 0, %s69
    %s86 = sphi 0, %s70
    %s92 = sphi 0, %s94
    %s95 = sphi 0, %s92
    %s96 = sphi 0, %s95
    %s112 = sphi 0, %s96
  $region4: #{apply.1} parent=0 // loop_header_branch
    %12 = sbr.rel (%p10) target = $region8
  $region5: #{apply.1} parent=0 // loop_body
    %s14 = ssub.s32 %s9, 1
    %s15 = ssub.s32 %s9, 2
    %s16 = sadd.s32 %s9, 1
    %s17 = ssub.s32 %s9, %s16
    %p18 = scmp.eq.s32.totalorder %s17, 0
    %s20 = sadd.s32 %s19, 1
    %s21 = scalar_select %p18, %s19, %s20
    %p24 = pneg %p18
    %p25 = scmp.eq.s32.totalorder %s9, 3
    %p26 = por %p24, %p25
    %p27 = scmp.ne.s32.totalorder %s19, %s22
    %p28 = scmp.eq.s32.totalorder %s9, 0
    %p29 = por %p27, %p28
    %p30 = scmp.ne.s32.totalorder %s19, %s22
    %p31 = scmp.eq.s32.totalorder %s14, 3
    %p32 = por %p30, %p31
    %p33 = scmp.ne.s32.totalorder %s22, %s23
    %p34 = scmp.eq.s32.totalorder %s14, 0
    %p35 = por %p33, %p34
    %p36 = scmp.ne.s32.totalorder %s22, %s23
    %p37 = scmp.eq.s32.totalorder %s15, 3
    %p38 = por %p36, %p37
    %p40 = scmp.ne.s32.totalorder %s23, %s39
    %p41 = scmp.eq.s32.totalorder %s15, 0
    %p42 = por %p40, %p41
    %s44 = sadd.s32 %s43, 1
    %p47 = scmp.eq.s32.totalorder %s9, 3
    %p48 = scmp.ne.s32.totalorder %s43, %s45
    %p49 = scmp.eq.s32.totalorder %s9, 0
    %p50 = por %p48, %p49
    %p51 = scmp.ne.s32.totalorder %s43, %s45
    %p52 = scmp.eq.s32.totalorder %s14, 3
    %p53 = por %p51, %p52
    %p54 = scmp.ne.s32.totalorder %s45, %s46
    %p55 = scmp.eq.s32.totalorder %s14, 0
    %p56 = por %p54, %p55
    %p57 = scmp.ne.s32.totalorder %s45, %s46
    %p58 = scmp.eq.s32.totalorder %s15, 3
    %p59 = por %p57, %p58
    %p61 = scmp.ne.s32.totalorder %s46, %s60
    %p62 = scmp.eq.s32.totalorder %s15, 0
    %p63 = por %p61, %p62
    %s64 = ssub.s32 %s9, %s16
    %p65 = scmp.eq.s32.totalorder %s64, 0
    %s67 = sadd.s32 %s66, 1
    %s68 = scalar_select %p65, %s66, %s67
    %p71 = pneg %p65
    %p72 = scmp.eq.s32.totalorder %s9, 3
    %p73 = por %p71, %p72
    %p74 = scmp.ne.s32.totalorder %s66, %s69
    %p75 = scmp.eq.s32.totalorder %s9, 0
    %p76 = por %p74, %p75
    %p77 = scmp.ne.s32.totalorder %s66, %s69
    %p78 = scmp.eq.s32.totalorder %s14, 3
    %p79 = por %p77, %p78
    %p80 = scmp.ne.s32.totalorder %s69, %s70
    %p81 = scmp.eq.s32.totalorder %s14, 0
    %p82 = por %p80, %p81
    %p83 = scmp.ne.s32.totalorder %s69, %s70
    %p84 = scmp.eq.s32.totalorder %s15, 3
    %p85 = por %p83, %p84
    %p87 = scmp.ne.s32.totalorder %s70, %s86
    %p88 = scmp.eq.s32.totalorder %s15, 0
    %p89 = por %p87, %p88
    %s90 = ssub.s32 %s9, %s16
    %p91 = scmp.eq.s32.totalorder %s90, 0
    %s93 = sadd.s32 %s92, 1
    %s94 = scalar_select %p91, %s92, %s93
    %p97 = pneg %p91
    %p98 = scmp.eq.s32.totalorder %s9, 3
    %p99 = por %p97, %p98
    %p100 = scmp.ne.s32.totalorder %s92, %s95
    %p101 = scmp.eq.s32.totalorder %s9, 0
    %p102 = por %p100, %p101
    %p103 = scmp.ne.s32.totalorder %s92, %s95
    %p104 = scmp.eq.s32.totalorder %s14, 3
    %p105 = por %p103, %p104
    %p106 = scmp.ne.s32.totalorder %s95, %s96
    %p107 = scmp.eq.s32.totalorder %s14, 0
    %p108 = por %p106, %p107
    %p109 = scmp.ne.s32.totalorder %s95, %s96
    %p110 = scmp.eq.s32.totalorder %s15, 3
    %p111 = por %p109, %p110
    %p113 = scmp.ne.s32.totalorder %s96, %s112
    %p114 = scmp.eq.s32.totalorder %s15, 0
    %p115 = por %p113, %p114
    %p116 = scmp.le.s32.totalorder 1, %s9
    %p117 = scmp.lt.s32.totalorder %s9, 5
    %p118 = pnand %p116, %p117
    %p119 = pneg %p118
    // Predicated region
    $region9: #{apply.1} parent=5 // pred_check
      _
    $region10: #{apply.1} parent=5 // pred_check_branch
      %121 = sbr.rel (%p118) target = $region12
    $region11: #{apply.1} parent=5 // pred_region
      %s122 = ssub.s32 %s9, 1
      // Predicated region
      $region13: #{apply.1} parent=11 // pred_check
        %p123 = pneg %p56
      $region14: #{apply.1} parent=11 // pred_check_branch
        %125 = sbr.rel (%p123) target = $region16
      $region15: #{apply.1} parent=11 // pred_region
        _
      $region16: #{apply.1} parent=11 // pred_fallthru
        _
    $region12: #{apply.1} parent=5 // pred_fallthru
      _
    %p126 = scmp.lt.s32.totalorder %s9, 4
    // Predicated region
    $region17: #{apply.1} parent=5 // pred_check
      %p127 = pneg %p126
    $region18: #{apply.1} parent=5 // pred_check_branch
      %129 = sbr.rel (%p127) target = $region20
    $region19: #{apply.1} parent=5 // pred_region
      // Predicated region
      $region21: #{apply.1} parent=19 // pred_check
        %p130 = pneg %p29
      $region22: #{apply.1} parent=19 // pred_check_branch
        %132 = sbr.rel (%p130) target = $region24
      $region23: #{apply.1} parent=19 // pred_region
        %s133 = smul.u32 2, %s9
        %p134 = scmp.lt.s32.totalorder %s133, 7
        %s135 = scalar_select %p134, %s133, 7
        %s136 = smul.addr %s135, 8
        %s137 = scalar_lea.vmem %s0, %s136
        %s138 = smul.u32 2, %s9
      $region24: #{apply.1} parent=19 // pred_fallthru
        _
      // Predicated region
      $region25: #{apply.1} parent=19 // pred_check
        %p139 = pneg %p76
      $region26: #{apply.1} parent=19 // pred_check_branch
        %141 = sbr.rel (%p139) target = $region28
      $region27: #{apply.1} parent=19 // pred_region
        %s142 = smul.u32 2, %s9
        %p143 = scmp.lt.s32.totalorder %s142, 7
        %s144 = scalar_select %p143, %s142, 7
        %s145 = smul.addr %s144, 2
        %s146 = smul.addr %s145, 8
        %s147 = scalar_lea.vmem %s2, %s146
        %s148 = smul.u32 2, %s9
      $region28: #{apply.1} parent=19 // pred_fallthru
        _
    $region20: #{apply.1} parent=5 // pred_fallthru
      _
    %p149 = scmp.le.s32.totalorder 1, %s9
    %p150 = scmp.lt.s32.totalorder %s9, 5
    %p151 = pnand %p149, %p150
    %p152 = pneg %p151
    // Predicated region
    $region29: #{apply.1} parent=5 // pred_check
      _
    $region30: #{apply.1} parent=5 // pred_check_branch
      %154 = sbr.rel (%p151) target = $region32
    $region31: #{apply.1} parent=5 // pred_region
      %s155 = ssub.s32 %s9, 1
      %s156 = smul.u32 2, %s14
      %p157 = scmp.lt.s32.totalorder %s156, 7
      %s158 = scalar_select %p157, %s156, 7
      %s159 = smul.addr %s158, 8
      %s160 = scalar_lea.vmem %s0, %s159
      %p161 = pneg %p35
      %p162 = pneg %p32
      %p163 = pneg %p56
      %p164 = pneg %p53
      %s165 = smul.u32 2, %s14
      %p166 = scmp.lt.s32.totalorder %s165, 7
      %s167 = scalar_select %p166, %s165, 7
      %s168 = smul.addr %s167, 2
      %s169 = smul.addr %s168, 8
      %s170 = scalar_lea.vmem %s2, %s169
      %p171 = pneg %p82
      %p172 = pneg %p79
      %p173 = pneg %p108
      %p174 = pneg %p105
      %s175 = smul.u32 2, %s14
      %p176 = scmp.lt.s32.totalorder %s175, 7
      %s177 = scalar_select %p176, %s175, 7
      %s178 = smul.addr %s177, 2
      %s179 = smul.addr %s178, 8
      %s180 = scalar_lea.vmem %s3, %s179
      %s181 = smul.u32 2, %s14
      %p182 = scmp.lt.s32.totalorder %s181, 7
      %s183 = scalar_select %p182, %s181, 7
      %s184 = smul.addr %s183, 8
      %s185 = scalar_lea.vmem %s0, %s184
      %s186 = smul.u32 2, %s14
      %s187 = smul.u32 2, %s14
      %p188 = scmp.lt.s32.totalorder %s187, 7
      %s189 = scalar_select %p188, %s187, 7
      %s190 = smul.addr %s189, 2
      %s191 = smul.addr %s190, 8
      %s192 = scalar_lea.vmem %s2, %s191
      %s193 = smul.u32 2, %s14
      %s194 = smul.u32 2, %s14
      %p195 = scmp.lt.s32.totalorder %s194, 7
      %s196 = scalar_select %p195, %s194, 7
      %s197 = smul.addr %s196, 2
      %s198 = smul.addr %s197, 8
      %s199 = scalar_lea.vmem %s3, %s198
      %s200 = smul.u32 2, %s14
      %v201 = vld [vmem:[%s185] sm:$0xff]
      %v202 = vld [vmem:[%s185 + $0x8] sm:$0xff]
      %v203 = vld [vmem:[%s1] sm:$0xff]
      %v204 = vld [vmem:[%s1 + $0x8] sm:$0xff]
      %v205 = vld [vmem:[%s1 + $0x10] sm:$0xff]
      %v206 = vld [vmem:[%s1 + $0x18] sm:$0xff]
      %v207 = vld [vmem:[%s1 + $0x20] sm:$0xff]
      %v208 = vld [vmem:[%s1 + $0x28] sm:$0xff]
      %v209 = vld [vmem:[%s1 + $0x30] sm:$0xff]
      %v210 = vld [vmem:[%s1 + $0x38] sm:$0xff]
      %v211 = vld [vmem:[%s1 + $0x40] sm:$0xff]
      %v212 = vld [vmem:[%s1 + $0x48] sm:$0xff]
      %v213 = vld [vmem:[%s1 + $0x50] sm:$0xff]
      %v214 = vld [vmem:[%s1 + $0x58] sm:$0xff]
      %v215 = vld [vmem:[%s1 + $0x60] sm:$0xff]
      %v216 = vld [vmem:[%s1 + $0x68] sm:$0xff]
      %v217 = vld [vmem:[%s1 + $0x70] sm:$0xff]
      %v218 = vld [vmem:[%s1 + $0x78] sm:$0xff]
      %v219 = vld [vmem:[%s1 + $0x80] sm:$0xff]
      %v220 = vld [vmem:[%s1 + $0x88] sm:$0xff]
      %v221 = vld [vmem:[%s1 + $0x90] sm:$0xff]
      %v222 = vld [vmem:[%s1 + $0x98] sm:$0xff]
      %v223 = vld [vmem:[%s1 + $0xa0] sm:$0xff]
      %v224 = vld [vmem:[%s1 + $0xa8] sm:$0xff]
      %v225 = vld [vmem:[%s1 + $0xb0] sm:$0xff]
      %v226 = vld [vmem:[%s1 + $0xb8] sm:$0xff]
      %v227 = vld [vmem:[%s1 + $0xc0] sm:$0xff]
      %v228 = vld [vmem:[%s1 + $0xc8] sm:$0xff]
      %v229 = vld [vmem:[%s1 + $0xd0] sm:$0xff]
      %v230 = vld [vmem:[%s1 + $0xd8] sm:$0xff]
      %v231 = vld [vmem:[%s1 + $0xe0] sm:$0xff]
      %v232 = vld [vmem:[%s1 + $0xe8] sm:$0xff]
      %v233 = vld [vmem:[%s1 + $0xf0] sm:$0xff]
      %v234 = vld [vmem:[%s1 + $0xf8] sm:$0xff]
      %235 = vmatpush.msra.mxu0 %v233
      %236 = vmatpush.msra.mxu0 %v231
      %237 = vmatpush.msra.mxu0 %v229
      %238 = vmatpush.msra.mxu0 %v227
      %239 = vmatpush.msra.mxu0 %v225
      %240 = vmatpush.msra.mxu0 %v223
      %241 = vmatpush.msra.mxu0 %v221
      %242 = vmatpush.msra.mxu0 %v219
      %243 = vmatpush.msra.mxu0 %v217
      %244 = vmatpush.msra.mxu0 %v215
      %245 = vmatpush.msra.mxu0 %v213
      %246 = vmatpush.msra.mxu0 %v211
      %247 = vmatpush.msra.mxu0 %v209
      %248 = vmatpush.msra.mxu0 %v207
      %249 = vmatpush.msra.mxu0 %v205
      %250 = vmatpush.msra.mxu0 %v203
      %251 = vmatmul.f32.gmra.mxu0 %v201
      %v252 = vpop.f32.mrf.mxu0
      %v253 = vadd.f32 0.0, %v252
      %254 = vmatmul.f32.gmra.mxu0 %v202
      %v255 = vpop.f32.mrf.mxu0
      %v256 = vadd.f32 0.0, %v255
      %257 = vdwg.mxu0
      %258 = vmatpush.msra.mxu0 %v234
      %259 = vmatpush.msra.mxu0 %v232
      %260 = vmatpush.msra.mxu0 %v230
      %261 = vmatpush.msra.mxu0 %v228
      %262 = vmatpush.msra.mxu0 %v226
      %263 = vmatpush.msra.mxu0 %v224
      %264 = vmatpush.msra.mxu0 %v222
      %265 = vmatpush.msra.mxu0 %v220
      %266 = vmatpush.msra.mxu0 %v218
      %267 = vmatpush.msra.mxu0 %v216
      %268 = vmatpush.msra.mxu0 %v214
      %269 = vmatpush.msra.mxu0 %v212
      %270 = vmatpush.msra.mxu0 %v210
      %271 = vmatpush.msra.mxu0 %v208
      %272 = vmatpush.msra.mxu0 %v206
      %273 = vmatpush.msra.mxu0 %v204
      %274 = vmatmul.f32.gmra.mxu0 %v201
      %v275 = vpop.f32.mrf.mxu0
      %v276 = vadd.f32 0.0, %v275
      %277 = vmatmul.f32.gmra.mxu0 %v202
      %v278 = vpop.f32.mrf.mxu0
      %v279 = vadd.f32 0.0, %v278
      %280 = vdwg.mxu0
      %v281 = vld [vmem:[%s192] sm:$0xff]
      %v282 = vld [vmem:[%s192 + $0x8] sm:$0xff]
      %v283 = vld [vmem:[%s192 + $0x10] sm:$0xff]
      %v284 = vld [vmem:[%s192 + $0x18] sm:$0xff]
      %v285 = vadd.f32 %v281, %v253
      %v286 = vadd.f32 %v282, %v276
      %v287 = vadd.f32 %v283, %v256
      %v288 = vadd.f32 %v284, %v279
      %289 = vst [vmem:[%s199] sm:$0xff] %v285
      %290 = vst [vmem:[%s199 + $0x8] sm:$0xff] %v286
      %291 = vst [vmem:[%s199 + $0x10] sm:$0xff] %v287
      %292 = vst [vmem:[%s199 + $0x18] sm:$0xff] %v288
      %s293 = smul.u32 2, %s14
      %p294 = scmp.lt.s32.totalorder %s293, 7
      %s295 = scalar_select %p294, %s293, 7
      %s296 = smul.addr %s295, 2
      %s297 = smul.addr %s296, 8
      %s298 = scalar_lea.vmem %s3, %s297
      // Predicated region
      $region33: #{apply.1} parent=31 // pred_check
        %p299 = pneg %p105
      $region34: #{apply.1} parent=31 // pred_check_branch
        %301 = sbr.rel (%p299) target = $region36
      $region35: #{apply.1} parent=31 // pred_region
        %s302 = smul.u32 2, %s14
      $region36: #{apply.1} parent=31 // pred_fallthru
        _
    $region32: #{apply.1} parent=5 // pred_fallthru
      _
    %p303 = scmp.le.s32.totalorder 2, %s9
    // Predicated region
    $region37: #{apply.1} parent=5 // pred_check
      %p304 = pneg %p303
    $region38: #{apply.1} parent=5 // pred_check_branch
      %306 = sbr.rel (%p304) target = $region40
    $region39: #{apply.1} parent=5 // pred_region
      %s307 = ssub.s32 %s9, 2
      // Predicated region
      $region41: #{apply.1} parent=39 // pred_check
        %p308 = pneg %p111
      $region42: #{apply.1} parent=39 // pred_check_branch
        %310 = sbr.rel (%p308) target = $region44
      $region43: #{apply.1} parent=39 // pred_region
        %s311 = smul.u32 2, %s15
        %p312 = scmp.lt.s32.totalorder %s311, 7
        %s313 = scalar_select %p312, %s311, 7
        %s314 = smul.addr %s313, 2
        %s315 = smul.addr %s314, 8
        %s316 = scalar_lea.vmem %s3, %s315
      $region44: #{apply.1} parent=39 // pred_fallthru
        _
    $region40: #{apply.1} parent=5 // pred_fallthru
      _
  $region6: #{apply.1} parent=0 // loop_footer
    %s13 = sadd.s32 1, %s9
  $region7: #{apply.1} parent=0 // loop_footer_branch
    %8 = sbr.rel target = $region3
  $region8: #{apply.1} parent=0 // loop_exit
    _

</llo_original>
